<compile_context>
chip_gen: v5e
topology: v5e:2x2
jax: 0.10.0
libtpu: 0.0.40
codegen_flags: <defaults>
</compile_context>

<pallas_src>
import jax
import jax.numpy as jnp
from jax.experimental import pallas as pl
from jax.experimental.pallas import tpu as pltpu


_MIB = 1024 * 1024


# ----------------------------------------------------------------------------- #
# VMEM policy / tile-size selection
# ----------------------------------------------------------------------------- #
def _tpu_vmem_bytes():
    try:
        return int(pltpu.get_tpu_info().vmem_capacity_bytes)
    except Exception:
        return 64 * _MIB  # conservative: v7x per-TensorCore VMEM


def _vmem_policy():
    """Generation-aware VMEM policy.

    v5e/v6e: 128 MiB physical VMEM, 1 TensorCore/chip -> big tiles, no need to
             keep >=2 grid steps (grid is a serial loop there).
    v7x:     64 MiB per TensorCore, 2 TCs/chip -> smaller budget, keep >=2 grid
             steps so megacore sharding of the "parallel" batch axis has work.
    """
    vmem = _tpu_vmem_bytes()
    if vmem >= 96 * _MIB:  # v5e / v6e class
        return dict(data_budget=88 * _MIB, vmem_limit=104 * _MIB, multi_tc=False)
    # v7x class (<=64 MiB per TC, 2 TCs per chip)
    return dict(data_budget=24 * _MIB, vmem_limit=48 * _MIB, multi_tc=True)


def _padded_tile_bytes(c, hw, itemsize):
    """VMEM bytes of one (C, HW) image tile including (sublane, lane) padding."""
    sublane = max(8, 32 // itemsize)      # 8 for f32, 16 for bf16, 32 for int8
    c_pad = pl.cdiv(c, sublane) * sublane
    hw_pad = pl.cdiv(hw, 128) * 128
    return c_pad * hw_pad * itemsize


def _pick_batch_block(n, c, hw, cr, itemsize, *, data_budget, multi_tc):
    """Largest batch tile Nb whose double-buffered in+out tiles fit the budget.

    Returns 0 if even a single image does not fit (caller uses the two-pass
    HW-streaming fallback)."""
    img = _padded_tile_bytes(c, hw, itemsize)
    weights = 2 * (2 * c * cr + c + cr) * 4       # double-buffered f32 params
    budget = max(0, data_budget - weights)
    max_nb = budget // (4 * img)                  # 2 buffers x (input + output)
    if max_nb < 1:
        return 0
    max_nb = min(int(max_nb), n)
    if multi_tc and n >= 2:
        # keep >=2 grid steps so both v7x TensorCores get a share of the batch
        max_nb = min(max_nb, pl.cdiv(n, 2))
    return max(1, int(max_nb))


# ----------------------------------------------------------------------------- #
# Fused single-pass kernel (default path)
# ----------------------------------------------------------------------------- #
def _se_fused_kernel(x_ref, w1_ref, b1_ref, w2_ref, b2_ref, o_ref):
    # x_ref/o_ref: (Nb, C, HW) native dtype.
    # w1_ref: (C, Cr) f32 with 1/(H*W) folded in; b1_ref: (1, Cr) f32
    # w2_ref: (Cr, C) f32; b2_ref: (1, C) f32
    xsum = jnp.sum(x_ref[...], axis=-1, dtype=jnp.float32)                 # (Nb, C)
    h = jnp.dot(xsum, w1_ref[...], preferred_element_type=jnp.float32) + b1_ref[...]
    h = jnp.maximum(h, 0.0)
    s = jnp.dot(h, w2_ref[...], preferred_element_type=jnp.float32) + b2_ref[...]
    s = jax.nn.sigmoid(s)                                                  # (Nb, C)
    o_ref[...] = x_ref[...] * s.astype(o_ref.dtype)[:, :, None]


def _se_fused(x3, w1t, b1r, w2t, b2r, nb, vmem_limit):
    N, C, HW = x3.shape
    Cr = w1t.shape[1]
    itemsize = x3.dtype.itemsize
    grid_n = pl.cdiv(N, nb)
    cost = pl.CostEstimate(
        flops=4 * N * C * Cr,
        transcendentals=N * C,
        bytes_accessed=2 * N * C * HW * itemsize + (2 * C * Cr + C + Cr) * 4,
    )
    return pl.pallas_call(
        _se_fused_kernel,
        out_shape=jax.ShapeDtypeStruct((N, C, HW), x3.dtype),
        grid=(grid_n,),
        in_specs=[
            pl.BlockSpec((nb, C, HW), lambda n: (n, 0, 0)),   # batch tile of x
            pl.BlockSpec((C, Cr), lambda n: (0, 0)),          # FC1 weight (full)
            pl.BlockSpec((1, Cr), lambda n: (0, 0)),          # FC1 bias
            pl.BlockSpec((Cr, C), lambda n: (0, 0)),          # FC2 weight (full)
            pl.BlockSpec((1, C), lambda n: (0, 0)),           # FC2 bias
        ],
        out_specs=pl.BlockSpec((nb, C, HW), lambda n: (n, 0, 0)),
        compiler_params=pltpu.CompilerParams(
            dimension_semantics=("parallel",),
            vmem_limit_bytes=vmem_limit,
        ),
        cost_estimate=cost,
    )(x3, w1t, b1r, w2t, b2r)


# ----------------------------------------------------------------------------- #
# Two-pass HW-streaming fallback (single image too large for VMEM)
# ----------------------------------------------------------------------------- #
def _make_squeeze_excite_kernel(hw, hwb):
    ragged = (hw % hwb) != 0

    def kernel(x_ref, w1_ref, b1_ref, w2_ref, b2_ref, gate_ref, acc_ref):
        h = pl.program_id(1)

        @pl.when(h == 0)
        def _():
            acc_ref[...] = jnp.zeros_like(acc_ref)

        x = x_ref[...]                                                  # (1, C, HWb)
        if ragged:
            # Mask the out-of-bounds lanes of the last (padded) HW chunk.
            lane = jax.lax.broadcasted_iota(jnp.int32, x.shape, 2)
            x = jnp.where(h * hwb + lane < hw, x, 0)
        acc_ref[...] += jnp.sum(x, axis=-1, dtype=jnp.float32)          # (1, C)

        @pl.when(h == pl.num_programs(1) - 1)
        def _():
            z = jnp.dot(acc_ref[...], w1_ref[...],
                        preferred_element_type=jnp.float32) + b1_ref[...]
            z = jnp.maximum(z, 0.0)
            s = jnp.dot(z, w2_ref[...],
                        preferred_element_type=jnp.float32) + b2_ref[...]
            gate_ref[0] = jax.nn.sigmoid(s)                             # (1, C)

    return kernel


def _apply_gate_kernel(x_ref, gate_ref, o_ref):
    g = gate_ref[0, 0, :].astype(o_ref.dtype)                           # (C,)
    o_ref[...] = x_ref[...] * g[None, :, None]


def _se_two_pass(x3, w1t, b1r, w2t, b2r, data_budget, vmem_limit, hwb_override=None):
    N, C, HW = x3.shape
    Cr = w1t.shape[1]
    itemsize = x3.dtype.itemsize
    sublane = max(8, 32 // itemsize)
    c_pad = pl.cdiv(C, sublane) * sublane

    if hwb_override is not None:
        hwb = int(hwb_override)
    else:
        # Largest lane-aligned HW chunk whose double-buffered in+out tiles fit.
        max_lanes = max(1, data_budget // (4 * c_pad * itemsize))
        hwb = max(128, (max_lanes // 128) * 128)
        hwb = min(hwb, pl.cdiv(HW, 128) * 128)
    grid_hw = pl.cdiv(HW, hwb)

    squeeze_kernel = _make_squeeze_excite_kernel(HW, hwb)

    # Pass 1: accumulate spatial sums per (n, c), then excitation -> gate (N, 1, C).
    gate = pl.pallas_call(
        squeeze_kernel,
        out_shape=jax.ShapeDtypeStruct((N, 1, C), jnp.float32),
        grid=(N, grid_hw),
        in_specs=[
            pl.BlockSpec((1, C, hwb), lambda n, h: (n, 0, h)),
            pl.BlockSpec((C, Cr), lambda n, h: (0, 0)),
            pl.BlockSpec((1, Cr), lambda n, h: (0, 0)),
            pl.BlockSpec((Cr, C), lambda n, h: (0, 0)),
            pl.BlockSpec((1, C), lambda n, h: (0, 0)),
        ],
        out_specs=pl.BlockSpec((1, 1, C), lambda n, h: (n, 0, 0)),
        scratch_shapes=[pltpu.VMEM((1, C), jnp.float32)],
        compiler_params=pltpu.CompilerParams(
            dimension_semantics=("parallel", "arbitrary"),
            vmem_limit_bytes=vmem_limit,
        ),
        cost_estimate=pl.CostEstimate(
            flops=4 * N * C * Cr,
            transcendentals=N * C,
            bytes_accessed=N * C * HW * itemsize + (2 * C * Cr + C + Cr) * 4,
        ),
    )(x3, w1t, b1r, w2t, b2r)

    # Pass 2: re-stream x and apply the per-channel gate.
    out = pl.pallas_call(
        _apply_gate_kernel,
        out_shape=jax.ShapeDtypeStruct((N, C, HW), x3.dtype),
        grid=(N, grid_hw),
        in_specs=[
            pl.BlockSpec((1, C, hwb), lambda n, h: (n, 0, h)),
            pl.BlockSpec((1, 1, C), lambda n, h: (n, 0, 0)),
        ],
        out_specs=pl.BlockSpec((1, C, hwb), lambda n, h: (n, 0, h)),
        compiler_params=pltpu.CompilerParams(
            dimension_semantics=("parallel", "parallel"),
            vmem_limit_bytes=vmem_limit,
        ),
        cost_estimate=pl.CostEstimate(
            flops=N * C * HW,
            transcendentals=0,
            bytes_accessed=2 * N * C * HW * itemsize + N * C * 4,
        ),
    )(x3, gate)
    return out


# ----------------------------------------------------------------------------- #
# Public wrapper (matches SeBlock.forward semantics)
# ----------------------------------------------------------------------------- #
def se_block(x, w1, b1, w2, b2, *, _force_two_pass=False, _force_hw_block=None):
    """x: (N, C, H, W); w1: (Cr, C, 1, 1); b1: (Cr,); w2: (C, Cr, 1, 1); b2: (C,)."""
    N, C, H, W = x.shape
    Cr = w1.shape[0]
    HW = H * W

    policy = _vmem_policy()

    x3 = x.reshape(N, C, HW)
    # Fold the 1/(H*W) mean normalization into the FC1 weight (free, host side).
    w1t = (w1.reshape(Cr, C).T * (1.0 / HW)).astype(jnp.float32)   # (C, Cr)
    w2t = w2.reshape(C, Cr).T.astype(jnp.float32)                  # (Cr, C)
    b1r = b1.reshape(1, Cr).astype(jnp.float32)
    b2r = b2.reshape(1, C).astype(jnp.float32)

    nb = 0 if _force_two_pass else _pick_batch_block(
        N, C, HW, Cr, x.dtype.itemsize,
        data_budget=policy["data_budget"], multi_tc=policy["multi_tc"])

    if nb >= 1:
        out = _se_fused(x3, w1t, b1r, w2t, b2r, nb, policy["vmem_limit"])
    else:
        out = _se_two_pass(x3, w1t, b1r, w2t, b2r,
                           policy["data_budget"], policy["vmem_limit"],
                           hwb_override=_force_hw_block)
    return out.reshape(N, C, H, W)


def se_block_ref(x, w1, b1, w2, b2):
    # Pure-JAX reference for correctness checking.
    Cr = w1.shape[0]
    C = w2.shape[0]
    y = jnp.mean(x, axis=(2, 3))                                    # (N, C)
    h = jnp.maximum(y @ w1.reshape(Cr, C).T + b1, 0.0)              # (N, Cr)
    s = jax.nn.sigmoid(h @ w2.reshape(C, Cr).T + b2)                # (N, C)
    return x * s[:, :, None, None]


if __name__ == "__main__":
    key = jax.random.PRNGKey(0)
    kx, kw1, kb1, kw2, kb2, kx2 = jax.random.split(key, 6)

    # ---- Fused (default) path: N=2, C=8, H=W=16, reduction=4 ----
    N, C, H, W = 2, 8, 16, 16
    reduction = 4
    Cr = C // reduction

    x = jax.random.normal(kx, (N, C, H, W), dtype=jnp.float32)
    w1 = jax.random.normal(kw1, (Cr, C, 1, 1), dtype=jnp.float32) * 0.3
    b1 = jax.random.normal(kb1, (Cr,), dtype=jnp.float32) * 0.1
    w2 = jax.random.normal(kw2, (C, Cr, 1, 1), dtype=jnp.float32) * 0.3
    b2 = jax.random.normal(kb2, (C,), dtype=jnp.float32) * 0.1

    out = jax.block_until_ready(se_block(x, w1, b1, w2, b2))
    ref = se_block_ref(x, w1, b1, w2, b2)
    assert out.shape == x.shape
    assert jnp.allclose(out, ref, atol=1e-5, rtol=1e-5), "fused path mismatch"

    # ---- Forced two-pass HW-streaming path (exercises accumulation + ragged mask) ----
    H2, W2 = 12, 12                       # HW=144 -> two 128-lane chunks, ragged tail
    x2 = jax.random.normal(kx2, (N, C, H2, W2), dtype=jnp.float32)
    out2 = jax.block_until_ready(
        se_block(x2, w1, b1, w2, b2, _force_two_pass=True, _force_hw_block=128))
    ref2 = se_block_ref(x2, w1, b1, w2, b2)
    assert out2.shape == x2.shape
    assert jnp.allclose(out2, ref2, atol=1e-5, rtol=1e-5), "two-pass path mismatch"

    print("KERNEL_OK")
</pallas_src>

<mosaic_0001>
module attributes {stable_mosaic.version = 11 : i64} {
  func.func @_se_fused_kernel(%arg0: i32, %arg1: memref<1x8x256xf32, #tpu.memory_space<vmem>>, %arg2: memref<8x2xf32, #tpu.memory_space<vmem>>, %arg3: memref<1x2xf32, #tpu.memory_space<vmem>>, %arg4: memref<2x8xf32, #tpu.memory_space<vmem>>, %arg5: memref<1x8xf32, #tpu.memory_space<vmem>>, %arg6: memref<1x8x256xf32, #tpu.memory_space<vmem>>) attributes {dimension_semantics = [#tpu.dimension_semantics<parallel>], iteration_bounds = array<i64: 2>, scalar_prefetch = 0 : i64, scratch_operands = 0 : i64, tpu.core_type = #tpu.core_type<tc>, window_params = [{transform_indices = @transform_0, window_bounds = array<i64: 1, 8, 256>}, {pipeline_mode = #tpu.pipeline_mode<synchronous>, transform_indices = @transform_1, window_bounds = array<i64: 8, 2>}, {pipeline_mode = #tpu.pipeline_mode<synchronous>, transform_indices = @transform_2, window_bounds = array<i64: 1, 2>}, {pipeline_mode = #tpu.pipeline_mode<synchronous>, transform_indices = @transform_3, window_bounds = array<i64: 2, 8>}, {pipeline_mode = #tpu.pipeline_mode<synchronous>, transform_indices = @transform_4, window_bounds = array<i64: 1, 8>}, {transform_indices = @transform_5, window_bounds = array<i64: 1, 8, 256>}]} {
    %c0 = arith.constant 0 : index
    %c0_0 = arith.constant 0 : index
    %c0_1 = arith.constant 0 : index
    %0 = vector.load %arg1[%c0, %c0_0, %c0_1] : memref<1x8x256xf32, #tpu.memory_space<vmem>>, vector<1x8x256xf32>
    %cst = arith.constant dense<0.000000e+00> : vector<1x8xf32>
    %1 = vector.multi_reduction <add>, %0, %cst [2] : vector<1x8x256xf32> to vector<1x8xf32>
    %c0_2 = arith.constant 0 : index
    %c0_3 = arith.constant 0 : index
    %2 = vector.load %arg2[%c0_2, %c0_3] : memref<8x2xf32, #tpu.memory_space<vmem>>, vector<8x2xf32>
    %cst_4 = arith.constant dense<0.000000e+00> : vector<1x2xf32>
    %3 = tpu.matmul %1, %2, %cst_4 {dimension_numbers = #tpu.dot_dimension_numbers<[1], [0], [0], [1], [0, 0, 1, 1], [], []>} : vector<1x8xf32>, vector<8x2xf32>, vector<1x2xf32> -> vector<1x2xf32>
    %c0_5 = arith.constant 0 : index
    %c0_6 = arith.constant 0 : index
    %4 = vector.load %arg3[%c0_5, %c0_6] : memref<1x2xf32, #tpu.memory_space<vmem>>, vector<1x2xf32>
    %5 = arith.addf %3, %4 : vector<1x2xf32>
    %cst_7 = arith.constant 0.000000e+00 : f32
    %6 = vector.broadcast %cst_7 : f32 to vector<1x2xf32>
    %7 = arith.maximumf %5, %6 : vector<1x2xf32>
    %c0_8 = arith.constant 0 : index
    %c0_9 = arith.constant 0 : index
    %8 = vector.load %arg4[%c0_8, %c0_9] : memref<2x8xf32, #tpu.memory_space<vmem>>, vector<2x8xf32>
    %cst_10 = arith.constant dense<0.000000e+00> : vector<1x8xf32>
    %9 = tpu.matmul %7, %8, %cst_10 {dimension_numbers = #tpu.dot_dimension_numbers<[1], [0], [0], [1], [0, 0, 1, 1], [], []>} : vector<1x2xf32>, vector<2x8xf32>, vector<1x8xf32> -> vector<1x8xf32>
    %c0_11 = arith.constant 0 : index
    %c0_12 = arith.constant 0 : index
    %10 = vector.load %arg5[%c0_11, %c0_12] : memref<1x8xf32, #tpu.memory_space<vmem>>, vector<1x8xf32>
    %11 = arith.addf %9, %10 : vector<1x8xf32>
    %12 = arith.negf %11 : vector<1x8xf32>
    %13 = math.exp %12 : vector<1x8xf32>
    %cst_13 = arith.constant 1.000000e+00 : f32
    %14 = vector.broadcast %cst_13 : f32 to vector<1x8xf32>
    %15 = arith.addf %14, %13 : vector<1x8xf32>
    %16 = arith.divf %14, %15 : vector<1x8xf32>
    %c0_14 = arith.constant 0 : index
    %c0_15 = arith.constant 0 : index
    %c0_16 = arith.constant 0 : index
    %17 = vector.load %arg1[%c0_14, %c0_15, %c0_16] : memref<1x8x256xf32, #tpu.memory_space<vmem>>, vector<1x8x256xf32>
    %18 = vector.shape_cast %16 : vector<1x8xf32> to vector<1x8x1xf32>
    %19 = vector.broadcast %18 : vector<1x8x1xf32> to vector<1x8x256xf32>
    %20 = arith.mulf %17, %19 : vector<1x8x256xf32>
    %c0_17 = arith.constant 0 : index
    %c0_18 = arith.constant 0 : index
    %c0_19 = arith.constant 0 : index
    %21 = vector.load %arg6[%c0_17, %c0_18, %c0_19] : memref<1x8x256xf32, #tpu.memory_space<vmem>>, vector<1x8x256xf32>
    tpu.vector_store %arg6[%c0_17, %c0_18, %c0_19], %20 {strides = array<i32>} : memref<1x8x256xf32, #tpu.memory_space<vmem>>, vector<1x8x256xf32>,
    return
  }
  func.func @transform_0(%arg0: i32) -> (i32, i32, i32) {
    %c0_i32 = arith.constant 0 : i32
    %c0_i32_0 = arith.constant 0 : i32
    %c0_i32_1 = arith.constant 0 : i32
    return %arg0, %c0_i32, %c0_i32_0 : i32, i32, i32
  }
  func.func @transform_1(%arg0: i32) -> (i32, i32) {
    %c0_i32 = arith.constant 0 : i32
    %c0_i32_0 = arith.constant 0 : i32
    %c0_i32_1 = arith.constant 0 : i32
    return %c0_i32, %c0_i32_0 : i32, i32
  }
  func.func @transform_2(%arg0: i32) -> (i32, i32) {
    %c0_i32 = arith.constant 0 : i32
    %c0_i32_0 = arith.constant 0 : i32
    %c0_i32_1 = arith.constant 0 : i32
    return %c0_i32, %c0_i32_0 : i32, i32
  }
  func.func @transform_3(%arg0: i32) -> (i32, i32) {
    %c0_i32 = arith.constant 0 : i32
    %c0_i32_0 = arith.constant 0 : i32
    %c0_i32_1 = arith.constant 0 : i32
    return %c0_i32, %c0_i32_0 : i32, i32
  }
  func.func @transform_4(%arg0: i32) -> (i32, i32) {
    %c0_i32 = arith.constant 0 : i32
    %c0_i32_0 = arith.constant 0 : i32
    %c0_i32_1 = arith.constant 0 : i32
    return %c0_i32, %c0_i32_0 : i32, i32
  }
  func.func @transform_5(%arg0: i32) -> (i32, i32, i32) {
    %c0_i32 = arith.constant 0 : i32
    %c0_i32_0 = arith.constant 0 : i32
    %c0_i32_1 = arith.constant 0 : i32
    return %arg0, %c0_i32, %c0_i32_0 : i32, i32, i32
  }
}

</mosaic_0001>

<llo_original>
// kernel: tpu_custom_call.1
$region0: #{tpu_custom_call.1}
  #allocation0 [shape = 'u32[]', space=smem, size = 0x4, offset = 0x4, fixed_abs, tag = 'smem constant byte address 0x4 - core index']
  #allocation1 [shape = 'u32[72,128]{1,0:T(1,128)}', space=vmem, size = 0x9000, scoped, tag = 'internal scratch']
  %s0 = inlined_call_operand.hbm [shape: f32[2,8,256], index: 0, kind: input, shape index: {}]
  %s1 = inlined_call_operand.vmem [shape: f32[8,2], index: 1, kind: input, shape index: {}]
  %s2 = inlined_call_operand.vmem [shape: f32[1,2], index: 2, kind: input, shape index: {}]
  %s3 = inlined_call_operand.vmem [shape: f32[2,8], index: 3, kind: input, shape index: {}]
  %s4 = inlined_call_operand.vmem [shape: f32[1,8], index: 4, kind: input, shape index: {}]
  %s5 = inlined_call_operand.hbm [shape: f32[2,8,256], index: 5, kind: output, shape index: {}]
  %s6 = sld [smem:[#allocation0]]
  $region57: #{tpu_custom_call.1} parent=0
    _
  %s8 = ssub.s32 1, %s6
  %s9 = scalar_select 0, %s8, %s6
  $region1: #{tpu_custom_call.1} parent=0
    #allocation2 [shape = 'u8[16384]{0}', space=vmem, size = 0x4000, scoped, tag = 'input window, operand 0']
    #allocation3 [shape = 's32[2]{0}', space=sflag, size = 0x8, scoped, tag = 'scoped memory for tpu_custom_call.1']
    #allocation4 [shape = 's32[2]{0}', space=sflag, size = 0x8, scoped, tag = 'scoped memory for tpu_custom_call.1']
    #allocation5 [shape = 'u8[16384]{0}', space=vmem, size = 0x4000, scoped, tag = 'output window, operand 0']
    %10 = vsyncpa [#allocation3], 0
    %s11 = scalar_lea.sflag [#allocation3], 1
    %12 = vsyncpa %s11, 0
    %13 = vsyncpa [#allocation4], 0
    %s14 = scalar_lea.sflag [#allocation4], 1
    %15 = vsyncpa %s14, 0
    loop: start=0, step=1, limit=4
    $region2: #{tpu_custom_call.1} parent=1 // loop_pre_header
      _
    $region3: #{tpu_custom_call.1} parent=1 // loop_header
      %s17 = sphi 0, %s21
      %p18 = scmp.ge.s32.totalorder %s17, 4
      %s27 = sphi 0, %s29
      %s30 = sphi 0, %s27
      %s31 = sphi 0, %s30
      %s47 = sphi 0, %s31
      %s51 = sphi 0, %s51
      %s53 = sphi 0, %s51
      %s54 = sphi 0, %s53
      %s68 = sphi 0, %s54
      %s72 = sphi 0, %s72
      %s74 = sphi 0, %s72
      %s75 = sphi 0, %s74
      %s89 = sphi 0, %s75
      %s93 = sphi 0, %s93
      %s95 = sphi 0, %s93
      %s96 = sphi 0, %s95
      %s110 = sphi 0, %s96
      %s114 = sphi 0, %s114
      %s116 = sphi 0, %s114
      %s117 = sphi 0, %s116
      %s131 = sphi 0, %s117
      %s137 = sphi 0, %s139
      %s140 = sphi 0, %s137
      %s141 = sphi 0, %s140
      %s157 = sphi 0, %s141
    $region4: #{tpu_custom_call.1} parent=1 // loop_header_branch
      %20 = sbr.rel (%p18) target = $region8
    $region5: #{tpu_custom_call.1} parent=1 // loop_body
      %s22 = ssub.s32 %s17, 1
      %s23 = ssub.s32 %s17, 2
      %s24 = sadd.s32 %s17, 1
      %s25 = ssub.s32 %s17, %s24
      %p26 = scmp.eq.s32.totalorder %s25, 0
      %s28 = sadd.s32 %s27, 1
      %s29 = scalar_select %p26, %s27, %s28
      %p32 = pneg %p26
      %p33 = scmp.eq.s32.totalorder %s17, 1
      %p34 = por %p32, %p33
      %p35 = scmp.ne.s32.totalorder %s27, %s30
      %p36 = scmp.eq.s32.totalorder %s17, 0
      %p37 = por %p35, %p36
      %p38 = scmp.ne.s32.totalorder %s27, %s30
      %p39 = scmp.eq.s32.totalorder %s22, 1
      %p40 = por %p38, %p39
      %p41 = scmp.ne.s32.totalorder %s30, %s31
      %p42 = scmp.eq.s32.totalorder %s22, 0
      %p43 = por %p41, %p42
      %p44 = scmp.ne.s32.totalorder %s30, %s31
      %p45 = scmp.eq.s32.totalorder %s23, 1
      %p46 = por %p44, %p45
      %p48 = scmp.ne.s32.totalorder %s31, %s47
      %p49 = scmp.eq.s32.totalorder %s23, 0
      %p50 = por %p48, %p49
      %s52 = sadd.s32 %s51, 1
      %p55 = scmp.eq.s32.totalorder %s17, 1
      %p56 = scmp.ne.s32.totalorder %s51, %s53
      %p57 = scmp.eq.s32.totalorder %s17, 0
      %p58 = por %p56, %p57
      %p59 = scmp.ne.s32.totalorder %s51, %s53
      %p60 = scmp.eq.s32.totalorder %s22, 1
      %p61 = por %p59, %p60
      %p62 = scmp.ne.s32.totalorder %s53, %s54
      %p63 = scmp.eq.s32.totalorder %s22, 0
      %p64 = por %p62, %p63
      %p65 = scmp.ne.s32.totalorder %s53, %s54
      %p66 = scmp.eq.s32.totalorder %s23, 1
      %p67 = por %p65, %p66
      %p69 = scmp.ne.s32.totalorder %s54, %s68
      %p70 = scmp.eq.s32.totalorder %s23, 0
      %p71 = por %p69, %p70
      %s73 = sadd.s32 %s72, 1
      %p76 = scmp.eq.s32.totalorder %s17, 1
      %p77 = scmp.ne.s32.totalorder %s72, %s74
      %p78 = scmp.eq.s32.totalorder %s17, 0
      %p79 = por %p77, %p78
      %p80 = scmp.ne.s32.totalorder %s72, %s74
      %p81 = scmp.eq.s32.totalorder %s22, 1
      %p82 = por %p80, %p81
      %p83 = scmp.ne.s32.totalorder %s74, %s75
      %p84 = scmp.eq.s32.totalorder %s22, 0
      %p85 = por %p83, %p84
      %p86 = scmp.ne.s32.totalorder %s74, %s75
      %p87 = scmp.eq.s32.totalorder %s23, 1
      %p88 = por %p86, %p87
      %p90 = scmp.ne.s32.totalorder %s75, %s89
      %p91 = scmp.eq.s32.totalorder %s23, 0
      %p92 = por %p90, %p91
      %s94 = sadd.s32 %s93, 1
      %p97 = scmp.eq.s32.totalorder %s17, 1
      %p98 = scmp.ne.s32.totalorder %s93, %s95
      %p99 = scmp.eq.s32.totalorder %s17, 0
      %p100 = por %p98, %p99
      %p101 = scmp.ne.s32.totalorder %s93, %s95
      %p102 = scmp.eq.s32.totalorder %s22, 1
      %p103 = por %p101, %p102
      %p104 = scmp.ne.s32.totalorder %s95, %s96
      %p105 = scmp.eq.s32.totalorder %s22, 0
      %p106 = por %p104, %p105
      %p107 = scmp.ne.s32.totalorder %s95, %s96
      %p108 = scmp.eq.s32.totalorder %s23, 1
      %p109 = por %p107, %p108
      %p111 = scmp.ne.s32.totalorder %s96, %s110
      %p112 = scmp.eq.s32.totalorder %s23, 0
      %p113 = por %p111, %p112
      %s115 = sadd.s32 %s114, 1
      %p118 = scmp.eq.s32.totalorder %s17, 1
      %p119 = scmp.ne.s32.totalorder %s114, %s116
      %p120 = scmp.eq.s32.totalorder %s17, 0
      %p121 = por %p119, %p120
      %p122 = scmp.ne.s32.totalorder %s114, %s116
      %p123 = scmp.eq.s32.totalorder %s22, 1
      %p124 = por %p122, %p123
      %p125 = scmp.ne.s32.totalorder %s116, %s117
      %p126 = scmp.eq.s32.totalorder %s22, 0
      %p127 = por %p125, %p126
      %p128 = scmp.ne.s32.totalorder %s116, %s117
      %p129 = scmp.eq.s32.totalorder %s23, 1
      %p130 = por %p128, %p129
      %p132 = scmp.ne.s32.totalorder %s117, %s131
      %p133 = scmp.eq.s32.totalorder %s23, 0
      %p134 = por %p132, %p133
      %s135 = ssub.s32 %s17, %s24
      %p136 = scmp.eq.s32.totalorder %s135, 0
      %s138 = sadd.s32 %s137, 1
      %s139 = scalar_select %p136, %s137, %s138
      %p142 = pneg %p136
      %p143 = scmp.eq.s32.totalorder %s17, 1
      %p144 = por %p142, %p143
      %p145 = scmp.ne.s32.totalorder %s137, %s140
      %p146 = scmp.eq.s32.totalorder %s17, 0
      %p147 = por %p145, %p146
      %p148 = scmp.ne.s32.totalorder %s137, %s140
      %p149 = scmp.eq.s32.totalorder %s22, 1
      %p150 = por %p148, %p149
      %p151 = scmp.ne.s32.totalorder %s140, %s141
      %p152 = scmp.eq.s32.totalorder %s22, 0
      %p153 = por %p151, %p152
      %p154 = scmp.ne.s32.totalorder %s140, %s141
      %p155 = scmp.eq.s32.totalorder %s23, 1
      %p156 = por %p154, %p155
      %p158 = scmp.ne.s32.totalorder %s141, %s157
      %p159 = scmp.eq.s32.totalorder %s23, 0
      %p160 = por %p158, %p159
      %p161 = scmp.le.s32.totalorder 1, %s17
      %p162 = scmp.lt.s32.totalorder %s17, 3
      %p163 = pnand %p161, %p162
      %p164 = pneg %p163
      // Predicated region
      $region9: #{tpu_custom_call.1} parent=5 // pred_check
        _
      $region10: #{tpu_custom_call.1} parent=5 // pred_check_branch
        %166 = sbr.rel (%p163) target = $region12
      $region11: #{tpu_custom_call.1} parent=5 // pred_region
        %s167 = ssub.s32 %s17, 1
        // Predicated region
        $region13: #{tpu_custom_call.1} parent=11 // pred_check
          %p168 = pneg %p64
        $region14: #{tpu_custom_call.1} parent=11 // pred_check_branch
          %170 = sbr.rel (%p168) target = $region16
        $region15: #{tpu_custom_call.1} parent=11 // pred_region
          _
        $region16: #{tpu_custom_call.1} parent=11 // pred_fallthru
          _
        // Predicated region
        $region17: #{tpu_custom_call.1} parent=11 // pred_check
          %p171 = pneg %p85
        $region18: #{tpu_custom_call.1} parent=11 // pred_check_branch
          %173 = sbr.rel (%p171) target = $region20
        $region19: #{tpu_custom_call.1} parent=11 // pred_region
          _
        $region20: #{tpu_custom_call.1} parent=11 // pred_fallthru
          _
        // Predicated region
        $region21: #{tpu_custom_call.1} parent=11 // pred_check
          %p174 = pneg %p106
        $region22: #{tpu_custom_call.1} parent=11 // pred_check_branch
          %176 = sbr.rel (%p174) target = $region24
        $region23: #{tpu_custom_call.1} parent=11 // pred_region
          _
        $region24: #{tpu_custom_call.1} parent=11 // pred_fallthru
          _
        // Predicated region
        $region25: #{tpu_custom_call.1} parent=11 // pred_check
          %p177 = pneg %p127
        $region26: #{tpu_custom_call.1} parent=11 // pred_check_branch
          %179 = sbr.rel (%p177) target = $region28
        $region27: #{tpu_custom_call.1} parent=11 // pred_region
          _
        $region28: #{tpu_custom_call.1} parent=11 // pred_fallthru
          _
      $region12: #{tpu_custom_call.1} parent=5 // pred_fallthru
        _
      %p180 = scmp.lt.s32.totalorder %s17, 2
      // Predicated region
      $region29: #{tpu_custom_call.1} parent=5 // pred_check
        %p181 = pneg %p180
      $region30: #{tpu_custom_call.1} parent=5 // pred_check_branch
        %183 = sbr.rel (%p181) target = $region32
      $region31: #{tpu_custom_call.1} parent=5 // pred_region
        // Predicated region
        $region33: #{tpu_custom_call.1} parent=31 // pred_check
          %p184 = pneg %p37
        $region34: #{tpu_custom_call.1} parent=31 // pred_check_branch
          %186 = sbr.rel (%p184) target = $region36
        $region35: #{tpu_custom_call.1} parent=31 // pred_region
          %s187 = sand.u32 %s27, 1
          %s188 = scalar_lea.sflag [#allocation3], %s187
          %s189 = sand.u32 %s27, 1
          %s190 = smul.addr %s189, 16
          %s191 = scalar_lea.vmem [#allocation2], %s190
          %193 = vsyncadd %s188, 0
          %s194 = smul.addr %s17, 2
          %s195 = smul.addr %s194, 8
          %s196 = scalar_lea.hbm %s0, %s195
          %s198 = sshll.u32 %s196, 4
          %s199 = int_to_ptr.hbm [resolvable:$true] %s198
          %s200 = sshll.u32 %s191, 4
          %s201 = int_to_ptr.vmem [resolvable:$true] %s200
          %203 = dma.hbm_to_vmem [thread:$0]  %s199, 256, %s201, %s188
        $region36: #{tpu_custom_call.1} parent=31 // pred_fallthru
          _
      $region32: #{tpu_custom_call.1} parent=5 // pred_fallthru
        _
      %p204 = scmp.le.s32.totalorder 1, %s17
      %p205 = scmp.lt.s32.totalorder %s17, 3
      %p206 = pnand %p204, %p205
      %p207 = pneg %p206
      // Predicated region
      $region37: #{tpu_custom_call.1} parent=5 // pred_check
        _
      $region38: #{tpu_custom_call.1} parent=5 // pred_check_branch
        %209 = sbr.rel (%p206) target = $region40
      $region39: #{tpu_custom_call.1} parent=5 // pred_region
        %s210 = ssub.s32 %s17, 1
        %s211 = sand.u32 %s30, 1
        %s212 = scalar_lea.sflag [#allocation3], %s211
        %s213 = sand.u32 %s30, 1
        %s214 = smul.addr %s213, 16
        %s215 = scalar_lea.vmem [#allocation2], %s214
        // Predicated region
        $region41: #{tpu_custom_call.1} parent=39 // pred_check
          %p216 = pneg %p43
        $region42: #{tpu_custom_call.1} parent=39 // pred_check_branch
          %218 = sbr.rel (%p216) target = $region44
        $region43: #{tpu_custom_call.1} parent=39 // pred_region
          %220 = dma.done %s212, 256
        $region44: #{tpu_custom_call.1} parent=39 // pred_fallthru
          _
        %s221 = sand.u32 %s30, 1
        %s222 = scalar_lea.sflag [#allocation3], %s221
        %s223 = sand.u32 %s30, 1
        %s224 = smul.addr %s223, 16
        %s225 = scalar_lea.vmem [#allocation2], %s224
        %p226 = pneg %p43
        %p227 = pneg %p40
        %p228 = pneg %p64
        %p229 = pneg %p61
        %p230 = pneg %p85
        %p231 = pneg %p82
        %p232 = pneg %p106
        %p233 = pneg %p103
        %p234 = pneg %p127
        %p235 = pneg %p124
        %p236 = pneg %p153
        %p237 = pneg %p150
        %s238 = sand.u32 %s140, 1
        %s239 = scalar_lea.sflag [#allocation4], %s238
        %s240 = sand.u32 %s140, 1
        %s241 = smul.addr %s240, 16
        %s242 = scalar_lea.vmem [#allocation5], %s241
        %v243 = vld [vmem:[%s215] sm:$0xff]
        %v244 = vld [vmem:[%s215 + $0x8] sm:$0xff]
        %v245 = vadd.f32 %v243, %v244
        %246 = vadd.xlane.f32.xlu0 %v245
        %v247 = vpop.xlane.xlu0 %246
        %v248 = vld [vmem:[%s1] sm:$0xff]
        %v249 = vld [vmem:[%s2] sm:$0x1]
        %v251 = vlaneseq
        %v252 = vand.u32 %v251, 127
        %v253 = vperm.slane %v247, %v252
        %vm254 = vcmask 64512
        %v255 = vsel %vm254, %v253, 0
        %257 = vmatpush.msra.mxu0 0.0
        %258 = vmatpush.msra.mxu0 0.0
        %259 = vmatpush.msra.mxu0 0.0
        %260 = vmatpush.msra.mxu0 0.0
        %261 = vmatpush.msra.mxu0 0.0
        %262 = vmatpush.msra.mxu0 0.0
        %263 = vmatpush.msra.mxu0 0.0
        %264 = vmatpush.msra.mxu0 0.0
        %265 = vmatpush.msra.mxu0 0.0
        %266 = vmatpush.msra.mxu0 0.0
        %267 = vmatpush.msra.mxu0 0.0
        %268 = vmatpush.msra.mxu0 0.0
        %269 = vmatpush.msra.mxu0 0.0
        %270 = vmatpush.msra.mxu0 0.0
        %271 = vmatpush.msra.mxu0 0.0
        %272 = vmatpush.msra.mxu0 %v248
        %273 = vmatmul.f32.gmra.mxu0 %v255
        %v274 = vpop.f32.mrf.mxu0
        %v275 = vadd.f32 %v249, %v274
        %276 = vdwg.mxu0
        %v277 = vmax.f32 %v275, 0.0
        %v278 = vld [vmem:[%s3] sm:$0x3]
        %v279 = vld [vmem:[%s4] sm:$0x1]
        %vm280 = vcmask 15360
        %v282 = vsel %vm280, %v277, 0
        %vm284 = vcmask 1041408
        %v286 = vsel %vm284, %v278, 0
        %288 = vmatpush.msra.mxu0 0.0
        %289 = vmatpush.msra.mxu0 0.0
        %290 = vmatpush.msra.mxu0 0.0
        %291 = vmatpush.msra.mxu0 0.0
        %292 = vmatpush.msra.mxu0 0.0
        %293 = vmatpush.msra.mxu0 0.0
        %294 = vmatpush.msra.mxu0 0.0
        %295 = vmatpush.msra.mxu0 0.0
        %296 = vmatpush.msra.mxu0 0.0
        %297 = vmatpush.msra.mxu0 0.0
        %298 = vmatpush.msra.mxu0 0.0
        %299 = vmatpush.msra.mxu0 0.0
        %300 = vmatpush.msra.mxu0 0.0
        %301 = vmatpush.msra.mxu0 0.0
        %302 = vmatpush.msra.mxu0 0.0
        %303 = vmatpush.msra.mxu0 %v286
        %304 = vmatmul.f32.gmra.mxu0 %v282
        %v305 = vpop.f32.mrf.mxu0
        %v306 = vadd.f32 %v279, %v305
        %307 = vdwg.mxu0
        %v308 = vxor.u32 %v306, 2147483648
        %v309 = vmul.f32 %v308, 1.442695
        %v310 = vpow.pop %v309
        %v311 = vadd.f32 %v310, 1.0
        %v312 = vrcp.pop %v311
        %v313 = vmul.f32 %v311, %v312
        %v314 = vsub.f32 1.0, %v313
        %v315 = vmul.f32 %v312, %v314
        %v316 = vadd.f32 %v312, %v315
        %vm317 = vweird.f32 %v311
        %vm318 = vweird.f32 %v312
        %vm319 = vmor %vm317, %vm318
        %v320 = vsel %vm319, %v312, %v316
        %v321 = vand.u32 2147483647, %v311
        %vm322 = vcmp.eq.f32.partialorder %v321, 8.507059e+37
        %v323 = vand.u32 %v311, 2147483648
        %v324 = vor.u32 1.1754944e-38, %v323
        %v325 = vsel %vm322, %v324, %v320
        %v326 = vmul.f32 1.0, %v325
        %v327 = vperm.slane %v326, 0
        %v328 = vlaneseq
        %v329 = vshrl.u32 %v328, 7
        %331 = vset.pattern.permute.xlu0 %v329
        %332 = vperm.xlu0 %331, %v327
        %v333 = vpop.permute.xlu0 %332
        %v334 = vmul.f32 %v243, %v333
        %v335 = vmul.f32 %v244, %v333
        %336 = vst [vmem:[%s242] sm:$0xff] %v334
        %337 = vst [vmem:[%s242 + $0x8] sm:$0xff] %v335
        %s338 = sand.u32 %s140, 1
        %s339 = scalar_lea.sflag [#allocation4], %s338
        %s340 = sand.u32 %s140, 1
        %s341 = smul.addr %s340, 16
        %s342 = scalar_lea.vmem [#allocation5], %s341
        // Predicated region
        $region45: #{tpu_custom_call.1} parent=39 // pred_check
          %p343 = pneg %p150
        $region46: #{tpu_custom_call.1} parent=39 // pred_check_branch
          %345 = sbr.rel (%p343) target = $region48
        $region47: #{tpu_custom_call.1} parent=39 // pred_region
          %347 = vsyncadd %s339, 0
          %s348 = smul.addr %s22, 2
          %s349 = smul.addr %s348, 8
          %s350 = scalar_lea.hbm %s5, %s349
          %s352 = sshll.u32 %s342, 4
          %s353 = int_to_ptr.vmem [resolvable:$true] %s352
          %s354 = sshll.u32 %s350, 4
          %s355 = int_to_ptr.hbm [resolvable:$true] %s354
          %357 = dma.vmem_to_hbm [thread:$0]  %s353, 256, %s355, %s339
        $region48: #{tpu_custom_call.1} parent=39 // pred_fallthru
          _
      $region40: #{tpu_custom_call.1} parent=5 // pred_fallthru
        _
      %p358 = scmp.le.s32.totalorder 2, %s17
      // Predicated region
      $region49: #{tpu_custom_call.1} parent=5 // pred_check
        %p359 = pneg %p358
      $region50: #{tpu_custom_call.1} parent=5 // pred_check_branch
        %361 = sbr.rel (%p359) target = $region52
      $region51: #{tpu_custom_call.1} parent=5 // pred_region
        %s362 = ssub.s32 %s17, 2
        // Predicated region
        $region53: #{tpu_custom_call.1} parent=51 // pred_check
          %p363 = pneg %p156
        $region54: #{tpu_custom_call.1} parent=51 // pred_check_branch
          %365 = sbr.rel (%p363) target = $region56
        $region55: #{tpu_custom_call.1} parent=51 // pred_region
          %s366 = sand.u32 %s141, 1
          %s367 = scalar_lea.sflag [#allocation4], %s366
          %s368 = sand.u32 %s141, 1
          %s369 = smul.addr %s368, 16
          %s370 = scalar_lea.vmem [#allocation5], %s369
          %372 = dma.done %s367, 256
        $region56: #{tpu_custom_call.1} parent=51 // pred_fallthru
          _
      $region52: #{tpu_custom_call.1} parent=5 // pred_fallthru
        _
    $region6: #{tpu_custom_call.1} parent=1 // loop_footer
      %s21 = sadd.s32 1, %s17
    $region7: #{tpu_custom_call.1} parent=1 // loop_footer_branch
      %16 = sbr.rel target = $region3
    $region8: #{tpu_custom_call.1} parent=1 // loop_exit
      _
    %373 = vsyncpa [#allocation3], 1
    %s374 = scalar_lea.sflag [#allocation3], 1
    %375 = vsyncpa %s374, 1
    %376 = vsyncpa [#allocation4], 1
    %s377 = scalar_lea.sflag [#allocation4], 1
    %378 = vsyncpa %s377, 1

</llo_original>
